<compile_context>
chip_gen: v7x
topology: tpu7x:2x2x1
jax: 0.10.0
libtpu: 0.0.40
codegen_flags: <defaults>
</compile_context>

<pallas_src>
import functools

import jax
import jax.numpy as jnp
from jax import lax
from jax.experimental import pallas as pl
from jax.experimental.pallas import tpu as pltpu


def _residual_block_kernel(x_ref, masks_ref, w1_ref, b1_ref, w2_ref, b2_ref,
                           out_ref, *, img_w: int):
    """Fused: conv1(3x3,pad=1) -> +b1 -> ReLU -> conv2(3x3,pad=1) -> +b2 -> +x -> ReLU.

    x_ref    : (1, Cin,  H*W)  one image, channel-planar, pixels on lanes
    masks_ref: (9, H*W)        per-tap halo validity masks (0/1 floats)
    w1_ref   : (Cout, 9*Cin)   conv1 weights, column = (ky*3+kx)*Cin + c
    b1_ref   : (Cout, 1)
    w2_ref   : (Cout, 9*Cout)
    b2_ref   : (Cout, 1)
    out_ref  : (1, Cout, H*W)
    """
    x = x_ref[0]                 # (Cin, HW)
    masks = masks_ref[...]       # (9, HW)
    hw = x.shape[-1]

    def im2col(a):
        # (C, HW) -> (9*C, HW).  Row (ky*3+kx)*C + c holds channel c of `a`
        # shifted by (ky-1, kx-1).  The shift is an XLU lane rotation; the
        # wrap-around / out-of-image positions are zeroed by the tap mask,
        # which implements the conv's zero padding with no padded buffer.
        taps = []
        for ky in range(3):
            for kx in range(3):
                t = ky * 3 + kx
                shift = (-((ky - 1) * img_w + (kx - 1))) % hw
                rolled = a if shift == 0 else pltpu.roll(a, shift, 1)
                taps.append(rolled * masks[t:t + 1, :])
        return jnp.concatenate(taps, axis=0)

    # conv1: one lane-dense MXU matmul, K = 9*Cin; bias added once, then ReLU.
    h = jnp.dot(w1_ref[...], im2col(x), preferred_element_type=jnp.float32)
    h = jnp.maximum(h + b1_ref[...], 0.0)

    # conv2 + bias + residual add + final ReLU (h never leaves registers/VMEM values).
    o = jnp.dot(w2_ref[...], im2col(h), preferred_element_type=jnp.float32)
    o = jnp.maximum(o + b2_ref[...] + x, 0.0)

    out_ref[0] = o.astype(out_ref.dtype)


def residual_block(x_nchw, w1, b1, w2, b2):
    """x_nchw: (N, C, H, W) float32. Weights in PyTorch OIHW layout."""
    N, C, H, W = x_nchw.shape
    Cout = w1.shape[0]
    assert C == Cout, "ResidualBlock residual add requires in_channels == out_channels"
    HW = H * W

    # NCHW is already channel-planar; just collapse the spatial dims (free reshape,
    # no transpose, no spatial pad in the wrapper -> no extra full-array HBM passes).
    x_flat = x_nchw.reshape(N, C, HW).astype(jnp.float32)

    # OIHW -> (Cout, 9*Cin), column index (ky*3+kx)*Cin + c  (matches im2col rows).
    w1f = jnp.transpose(w1, (0, 2, 3, 1)).reshape(Cout, 9 * C).astype(jnp.float32)
    w2f = jnp.transpose(w2, (0, 2, 3, 1)).reshape(Cout, 9 * Cout).astype(jnp.float32)
    b1f = b1.reshape(Cout, 1).astype(jnp.float32)
    b2f = b2.reshape(Cout, 1).astype(jnp.float32)

    # Per-tap border-validity masks (replace explicit zero padding): 9*H*W floats.
    yy, xx = jnp.meshgrid(jnp.arange(H), jnp.arange(W), indexing="ij")
    masks = jnp.stack(
        [((yy + dy >= 0) & (yy + dy < H) & (xx + dx >= 0) & (xx + dx < W)).reshape(HW)
         for dy in (-1, 0, 1) for dx in (-1, 0, 1)],
        axis=0).astype(jnp.float32)                       # (9, HW)

    kernel = functools.partial(_residual_block_kernel, img_w=W)

    out_flat = pl.pallas_call(
        kernel,
        out_shape=jax.ShapeDtypeStruct((N, Cout, HW), jnp.float32),
        grid=(N,),   # batch axis; "parallel" lets v7x's two TensorCores split it
        in_specs=[
            pl.BlockSpec((1, C, HW), lambda n: (n, 0, 0)),
            pl.BlockSpec((9, HW), lambda n: (0, 0)),
            pl.BlockSpec((Cout, 9 * C), lambda n: (0, 0)),
            pl.BlockSpec((Cout, 1), lambda n: (0, 0)),
            pl.BlockSpec((Cout, 9 * Cout), lambda n: (0, 0)),
            pl.BlockSpec((Cout, 1), lambda n: (0, 0)),
        ],
        out_specs=pl.BlockSpec((1, Cout, HW), lambda n: (n, 0, 0)),
        compiler_params=pltpu.CompilerParams(
            dimension_semantics=("parallel",)),
    )(x_flat, masks, w1f, b1f, w2f, b2f)

    return out_flat.reshape(N, Cout, H, W)


def _reference_forward(x, w1, b1, w2, b2):
    """Pure-JAX reference matching PyTorch semantics (NCHW, OIHW)."""
    dn = lax.conv_dimension_numbers(x.shape, w1.shape, ("NCHW", "OIHW", "NCHW"))
    h = lax.conv_general_dilated(x, w1, (1, 1), ((1, 1), (1, 1)),
                                 dimension_numbers=dn)
    h = jax.nn.relu(h + b1[None, :, None, None])
    o = lax.conv_general_dilated(h, w2, (1, 1), ((1, 1), (1, 1)),
                                 dimension_numbers=dn)
    o = o + b2[None, :, None, None]
    return jax.nn.relu(o + x)


if __name__ == "__main__":
    # small shapes consistent with the module's forward
    N, C, H, W = 2, 4, 16, 16

    key = jax.random.PRNGKey(0)
    kx, k1, k2, k3, k4 = jax.random.split(key, 5)

    x = jax.random.normal(kx, (N, C, H, W), jnp.float32)

    # deterministic, roughly PyTorch-scaled init (fan_in = C * 3 * 3)
    scale = 1.0 / jnp.sqrt(C * 9.0)
    w1 = jax.random.uniform(k1, (C, C, 3, 3), jnp.float32, -scale, scale)
    b1 = jax.random.uniform(k2, (C,), jnp.float32, -scale, scale)
    w2 = jax.random.uniform(k3, (C, C, 3, 3), jnp.float32, -scale, scale)
    b2 = jax.random.uniform(k4, (C,), jnp.float32, -scale, scale)

    out = jax.block_until_ready(residual_block(x, w1, b1, w2, b2))
    ref = jax.block_until_ready(_reference_forward(x, w1, b1, w2, b2))

    assert out.shape == (N, C, H, W)
    max_err = jnp.max(jnp.abs(out - ref))
    assert jnp.allclose(out, ref, atol=1e-3, rtol=1e-3), f"max abs err {max_err}"
    print("KERNEL_OK")
</pallas_src>

<mosaic_0001>
module attributes {stable_mosaic.version = 11 : i64} {
  func.func @_residual_block_kernel(%arg0: i32, %arg1: memref<1x4x256xf32, #tpu.memory_space<vmem>>, %arg2: memref<9x256xf32, #tpu.memory_space<vmem>>, %arg3: memref<4x36xf32, #tpu.memory_space<vmem>>, %arg4: memref<4x1xf32, #tpu.memory_space<vmem>>, %arg5: memref<4x36xf32, #tpu.memory_space<vmem>>, %arg6: memref<4x1xf32, #tpu.memory_space<vmem>>, %arg7: memref<1x4x256xf32, #tpu.memory_space<vmem>>) attributes {dimension_semantics = [#tpu.dimension_semantics<parallel>], iteration_bounds = array<i64: 2>, scalar_prefetch = 0 : i64, scratch_operands = 0 : i64, tpu.core_type = #tpu.core_type<tc>, window_params = [{transform_indices = @transform_0, window_bounds = array<i64: 1, 4, 256>}, {pipeline_mode = #tpu.pipeline_mode<synchronous>, transform_indices = @transform_1, window_bounds = array<i64: 9, 256>}, {pipeline_mode = #tpu.pipeline_mode<synchronous>, transform_indices = @transform_2, window_bounds = array<i64: 4, 36>}, {pipeline_mode = #tpu.pipeline_mode<synchronous>, transform_indices = @transform_3, window_bounds = array<i64: 4, 1>}, {pipeline_mode = #tpu.pipeline_mode<synchronous>, transform_indices = @transform_4, window_bounds = array<i64: 4, 36>}, {pipeline_mode = #tpu.pipeline_mode<synchronous>, transform_indices = @transform_5, window_bounds = array<i64: 4, 1>}, {transform_indices = @transform_6, window_bounds = array<i64: 1, 4, 256>}]} {
    %c0 = arith.constant 0 : index
    %c0_0 = arith.constant 0 : index
    %c0_1 = arith.constant 0 : index
    %0 = vector.load %arg1[%c0, %c0_0, %c0_1] : memref<1x4x256xf32, #tpu.memory_space<vmem>>, vector<1x4x256xf32>
    %1 = vector.shape_cast %0 : vector<1x4x256xf32> to vector<4x256xf32>
    %c0_2 = arith.constant 0 : index
    %c0_3 = arith.constant 0 : index
    %2 = vector.load %arg2[%c0_2, %c0_3] : memref<9x256xf32, #tpu.memory_space<vmem>>, vector<9x256xf32>
    %c0_4 = arith.constant 0 : index
    %c0_5 = arith.constant 0 : index
    %3 = vector.load %arg3[%c0_4, %c0_5] : memref<4x36xf32, #tpu.memory_space<vmem>>, vector<4x36xf32>
    %c17_i32 = arith.constant 17 : i32
    %4 = tpu.dynamic_rotate %1 by %c17_i32 dim 1 : vector<4x256xf32>, i32 -> vector<4x256xf32>
    %5 = vector.extract_strided_slice %2 {offsets = [0, 0], sizes = [1, 256], strides = [1, 1]} : vector<9x256xf32> to vector<1x256xf32>
    %6 = vector.broadcast %5 : vector<1x256xf32> to vector<4x256xf32>
    %7 = arith.mulf %4, %6 : vector<4x256xf32>
    %c16_i32 = arith.constant 16 : i32
    %8 = tpu.dynamic_rotate %1 by %c16_i32 dim 1 : vector<4x256xf32>, i32 -> vector<4x256xf32>
    %9 = vector.extract_strided_slice %2 {offsets = [1, 0], sizes = [1, 256], strides = [1, 1]} : vector<9x256xf32> to vector<1x256xf32>
    %10 = vector.broadcast %9 : vector<1x256xf32> to vector<4x256xf32>
    %11 = arith.mulf %8, %10 : vector<4x256xf32>
    %c15_i32 = arith.constant 15 : i32
    %12 = tpu.dynamic_rotate %1 by %c15_i32 dim 1 : vector<4x256xf32>, i32 -> vector<4x256xf32>
    %13 = vector.extract_strided_slice %2 {offsets = [2, 0], sizes = [1, 256], strides = [1, 1]} : vector<9x256xf32> to vector<1x256xf32>
    %14 = vector.broadcast %13 : vector<1x256xf32> to vector<4x256xf32>
    %15 = arith.mulf %12, %14 : vector<4x256xf32>
    %c1_i32 = arith.constant 1 : i32
    %16 = tpu.dynamic_rotate %1 by %c1_i32 dim 1 : vector<4x256xf32>, i32 -> vector<4x256xf32>
    %17 = vector.extract_strided_slice %2 {offsets = [3, 0], sizes = [1, 256], strides = [1, 1]} : vector<9x256xf32> to vector<1x256xf32>
    %18 = vector.broadcast %17 : vector<1x256xf32> to vector<4x256xf32>
    %19 = arith.mulf %16, %18 : vector<4x256xf32>
    %20 = vector.extract_strided_slice %2 {offsets = [4, 0], sizes = [1, 256], strides = [1, 1]} : vector<9x256xf32> to vector<1x256xf32>
    %21 = vector.broadcast %20 : vector<1x256xf32> to vector<4x256xf32>
    %22 = arith.mulf %1, %21 : vector<4x256xf32>
    %c255_i32 = arith.constant 255 : i32
    %23 = tpu.dynamic_rotate %1 by %c255_i32 dim 1 : vector<4x256xf32>, i32 -> vector<4x256xf32>
    %24 = vector.extract_strided_slice %2 {offsets = [5, 0], sizes = [1, 256], strides = [1, 1]} : vector<9x256xf32> to vector<1x256xf32>
    %25 = vector.broadcast %24 : vector<1x256xf32> to vector<4x256xf32>
    %26 = arith.mulf %23, %25 : vector<4x256xf32>
    %c241_i32 = arith.constant 241 : i32
    %27 = tpu.dynamic_rotate %1 by %c241_i32 dim 1 : vector<4x256xf32>, i32 -> vector<4x256xf32>
    %28 = vector.extract_strided_slice %2 {offsets = [6, 0], sizes = [1, 256], strides = [1, 1]} : vector<9x256xf32> to vector<1x256xf32>
    %29 = vector.broadcast %28 : vector<1x256xf32> to vector<4x256xf32>
    %30 = arith.mulf %27, %29 : vector<4x256xf32>
    %c240_i32 = arith.constant 240 : i32
    %31 = tpu.dynamic_rotate %1 by %c240_i32 dim 1 : vector<4x256xf32>, i32 -> vector<4x256xf32>
    %32 = vector.extract_strided_slice %2 {offsets = [7, 0], sizes = [1, 256], strides = [1, 1]} : vector<9x256xf32> to vector<1x256xf32>
    %33 = vector.broadcast %32 : vector<1x256xf32> to vector<4x256xf32>
    %34 = arith.mulf %31, %33 : vector<4x256xf32>
    %c239_i32 = arith.constant 239 : i32
    %35 = tpu.dynamic_rotate %1 by %c239_i32 dim 1 : vector<4x256xf32>, i32 -> vector<4x256xf32>
    %36 = vector.extract_strided_slice %2 {offsets = [8, 0], sizes = [1, 256], strides = [1, 1]} : vector<9x256xf32> to vector<1x256xf32>
    %37 = vector.broadcast %36 : vector<1x256xf32> to vector<4x256xf32>
    %38 = arith.mulf %35, %37 : vector<4x256xf32>
    %39 = tpu.concatenate %7, %11, %15, %19, %22, %26, %30, %34, %38 in 0 : vector<4x256xf32>, vector<4x256xf32>, vector<4x256xf32>, vector<4x256xf32>, vector<4x256xf32>, vector<4x256xf32>, vector<4x256xf32>, vector<4x256xf32>, vector<4x256xf32> -> vector<36x256xf32>
    %cst = arith.constant dense<0.000000e+00> : vector<4x256xf32>
    %40 = tpu.matmul %3, %39, %cst {dimension_numbers = #tpu.dot_dimension_numbers<[1], [0], [0], [1], [0, 0, 1, 1], [], []>} : vector<4x36xf32>, vector<36x256xf32>, vector<4x256xf32> -> vector<4x256xf32>
    %c0_6 = arith.constant 0 : index
    %c0_7 = arith.constant 0 : index
    %41 = vector.load %arg4[%c0_6, %c0_7] : memref<4x1xf32, #tpu.memory_space<vmem>>, vector<4x1xf32>
    %42 = vector.broadcast %41 : vector<4x1xf32> to vector<4x256xf32>
    %43 = arith.addf %40, %42 : vector<4x256xf32>
    %cst_8 = arith.constant 0.000000e+00 : f32
    %44 = vector.broadcast %cst_8 : f32 to vector<4x256xf32>
    %45 = arith.maximumf %43, %44 : vector<4x256xf32>
    %c0_9 = arith.constant 0 : index
    %c0_10 = arith.constant 0 : index
    %46 = vector.load %arg5[%c0_9, %c0_10] : memref<4x36xf32, #tpu.memory_space<vmem>>, vector<4x36xf32>
    %c17_i32_11 = arith.constant 17 : i32
    %47 = tpu.dynamic_rotate %45 by %c17_i32_11 dim 1 : vector<4x256xf32>, i32 -> vector<4x256xf32>
    %48 = vector.extract_strided_slice %2 {offsets = [0, 0], sizes = [1, 256], strides = [1, 1]} : vector<9x256xf32> to vector<1x256xf32>
    %49 = vector.broadcast %48 : vector<1x256xf32> to vector<4x256xf32>
    %50 = arith.mulf %47, %49 : vector<4x256xf32>
    %c16_i32_12 = arith.constant 16 : i32
    %51 = tpu.dynamic_rotate %45 by %c16_i32_12 dim 1 : vector<4x256xf32>, i32 -> vector<4x256xf32>
    %52 = vector.extract_strided_slice %2 {offsets = [1, 0], sizes = [1, 256], strides = [1, 1]} : vector<9x256xf32> to vector<1x256xf32>
    %53 = vector.broadcast %52 : vector<1x256xf32> to vector<4x256xf32>
    %54 = arith.mulf %51, %53 : vector<4x256xf32>
    %c15_i32_13 = arith.constant 15 : i32
    %55 = tpu.dynamic_rotate %45 by %c15_i32_13 dim 1 : vector<4x256xf32>, i32 -> vector<4x256xf32>
    %56 = vector.extract_strided_slice %2 {offsets = [2, 0], sizes = [1, 256], strides = [1, 1]} : vector<9x256xf32> to vector<1x256xf32>
    %57 = vector.broadcast %56 : vector<1x256xf32> to vector<4x256xf32>
    %58 = arith.mulf %55, %57 : vector<4x256xf32>
    %c1_i32_14 = arith.constant 1 : i32
    %59 = tpu.dynamic_rotate %45 by %c1_i32_14 dim 1 : vector<4x256xf32>, i32 -> vector<4x256xf32>
    %60 = vector.extract_strided_slice %2 {offsets = [3, 0], sizes = [1, 256], strides = [1, 1]} : vector<9x256xf32> to vector<1x256xf32>
    %61 = vector.broadcast %60 : vector<1x256xf32> to vector<4x256xf32>
    %62 = arith.mulf %59, %61 : vector<4x256xf32>
    %63 = vector.extract_strided_slice %2 {offsets = [4, 0], sizes = [1, 256], strides = [1, 1]} : vector<9x256xf32> to vector<1x256xf32>
    %64 = vector.broadcast %63 : vector<1x256xf32> to vector<4x256xf32>
    %65 = arith.mulf %45, %64 : vector<4x256xf32>
    %c255_i32_15 = arith.constant 255 : i32
    %66 = tpu.dynamic_rotate %45 by %c255_i32_15 dim 1 : vector<4x256xf32>, i32 -> vector<4x256xf32>
    %67 = vector.extract_strided_slice %2 {offsets = [5, 0], sizes = [1, 256], strides = [1, 1]} : vector<9x256xf32> to vector<1x256xf32>
    %68 = vector.broadcast %67 : vector<1x256xf32> to vector<4x256xf32>
    %69 = arith.mulf %66, %68 : vector<4x256xf32>
    %c241_i32_16 = arith.constant 241 : i32
    %70 = tpu.dynamic_rotate %45 by %c241_i32_16 dim 1 : vector<4x256xf32>, i32 -> vector<4x256xf32>
    %71 = vector.extract_strided_slice %2 {offsets = [6, 0], sizes = [1, 256], strides = [1, 1]} : vector<9x256xf32> to vector<1x256xf32>
    %72 = vector.broadcast %71 : vector<1x256xf32> to vector<4x256xf32>
    %73 = arith.mulf %70, %72 : vector<4x256xf32>
    %c240_i32_17 = arith.constant 240 : i32
    %74 = tpu.dynamic_rotate %45 by %c240_i32_17 dim 1 : vector<4x256xf32>, i32 -> vector<4x256xf32>
    %75 = vector.extract_strided_slice %2 {offsets = [7, 0], sizes = [1, 256], strides = [1, 1]} : vector<9x256xf32> to vector<1x256xf32>
    %76 = vector.broadcast %75 : vector<1x256xf32> to vector<4x256xf32>
    %77 = arith.mulf %74, %76 : vector<4x256xf32>
    %c239_i32_18 = arith.constant 239 : i32
    %78 = tpu.dynamic_rotate %45 by %c239_i32_18 dim 1 : vector<4x256xf32>, i32 -> vector<4x256xf32>
    %79 = vector.extract_strided_slice %2 {offsets = [8, 0], sizes = [1, 256], strides = [1, 1]} : vector<9x256xf32> to vector<1x256xf32>
    %80 = vector.broadcast %79 : vector<1x256xf32> to vector<4x256xf32>
    %81 = arith.mulf %78, %80 : vector<4x256xf32>
    %82 = tpu.concatenate %50, %54, %58, %62, %65, %69, %73, %77, %81 in 0 : vector<4x256xf32>, vector<4x256xf32>, vector<4x256xf32>, vector<4x256xf32>, vector<4x256xf32>, vector<4x256xf32>, vector<4x256xf32>, vector<4x256xf32>, vector<4x256xf32> -> vector<36x256xf32>
    %cst_19 = arith.constant dense<0.000000e+00> : vector<4x256xf32>
    %83 = tpu.matmul %46, %82, %cst_19 {dimension_numbers = #tpu.dot_dimension_numbers<[1], [0], [0], [1], [0, 0, 1, 1], [], []>} : vector<4x36xf32>, vector<36x256xf32>, vector<4x256xf32> -> vector<4x256xf32>
    %c0_20 = arith.constant 0 : index
    %c0_21 = arith.constant 0 : index
    %84 = vector.load %arg6[%c0_20, %c0_21] : memref<4x1xf32, #tpu.memory_space<vmem>>, vector<4x1xf32>
    %85 = vector.broadcast %84 : vector<4x1xf32> to vector<4x256xf32>
    %86 = arith.addf %83, %85 : vector<4x256xf32>
    %87 = arith.addf %86, %1 : vector<4x256xf32>
    %cst_22 = arith.constant 0.000000e+00 : f32
    %88 = vector.broadcast %cst_22 : f32 to vector<4x256xf32>
    %89 = arith.maximumf %87, %88 : vector<4x256xf32>
    %c0_23 = arith.constant 0 : index
    %c0_24 = arith.constant 0 : index
    %c0_25 = arith.constant 0 : index
    %90 = vector.load %arg7[%c0_23, %c0_24, %c0_25] : memref<1x4x256xf32, #tpu.memory_space<vmem>>, vector<1x4x256xf32>
    %91 = vector.shape_cast %90 : vector<1x4x256xf32> to vector<4x256xf32>
    %92 = vector.shape_cast %89 : vector<4x256xf32> to vector<1x4x256xf32>
    tpu.vector_store %arg7[%c0_23, %c0_24, %c0_25], %92 {strides = array<i32>} : memref<1x4x256xf32, #tpu.memory_space<vmem>>, vector<1x4x256xf32>,
    return
  }
  func.func @transform_0(%arg0: i32) -> (i32, i32, i32) {
    %c0_i32 = arith.constant 0 : i32
    %c0_i32_0 = arith.constant 0 : i32
    %c0_i32_1 = arith.constant 0 : i32
    return %arg0, %c0_i32, %c0_i32_0 : i32, i32, i32
  }
  func.func @transform_1(%arg0: i32) -> (i32, i32) {
    %c0_i32 = arith.constant 0 : i32
    %c0_i32_0 = arith.constant 0 : i32
    %c0_i32_1 = arith.constant 0 : i32
    return %c0_i32, %c0_i32_0 : i32, i32
  }
  func.func @transform_2(%arg0: i32) -> (i32, i32) {
    %c0_i32 = arith.constant 0 : i32
    %c0_i32_0 = arith.constant 0 : i32
    %c0_i32_1 = arith.constant 0 : i32
    return %c0_i32, %c0_i32_0 : i32, i32
  }
  func.func @transform_3(%arg0: i32) -> (i32, i32) {
    %c0_i32 = arith.constant 0 : i32
    %c0_i32_0 = arith.constant 0 : i32
    %c0_i32_1 = arith.constant 0 : i32
    return %c0_i32, %c0_i32_0 : i32, i32
  }
  func.func @transform_4(%arg0: i32) -> (i32, i32) {
    %c0_i32 = arith.constant 0 : i32
    %c0_i32_0 = arith.constant 0 : i32
    %c0_i32_1 = arith.constant 0 : i32
    return %c0_i32, %c0_i32_0 : i32, i32
  }
  func.func @transform_5(%arg0: i32) -> (i32, i32) {
    %c0_i32 = arith.constant 0 : i32
    %c0_i32_0 = arith.constant 0 : i32
    %c0_i32_1 = arith.constant 0 : i32
    return %c0_i32, %c0_i32_0 : i32, i32
  }
  func.func @transform_6(%arg0: i32) -> (i32, i32, i32) {
    %c0_i32 = arith.constant 0 : i32
    %c0_i32_0 = arith.constant 0 : i32
    %c0_i32_1 = arith.constant 0 : i32
    return %arg0, %c0_i32, %c0_i32_0 : i32, i32, i32
  }
}

</mosaic_0001>

<llo_original>
// kernel: tpu_custom_call.1
$region0: #{tpu_custom_call.1}
  #allocation0 [shape = 'u32[]', space=smem, size = 0x4, offset = 0x4, fixed_abs, tag = 'smem constant byte address 0x4 - core index']
  #allocation1 [shape = 'u32[144,128]{1,0:T(1,128)}', space=vmem, size = 0x12000, scoped, tag = 'internal scratch']
  %s0 = inlined_call_operand.hbm [shape: f32[2,4,256], index: 0, kind: input, shape index: {}]
  %s1 = inlined_call_operand.hbm [shape: f32[9,256], index: 1, kind: input, shape index: {}]
  %s2 = inlined_call_operand.vmem [shape: f32[4,36], index: 2, kind: input, shape index: {}]
  %s3 = inlined_call_operand.vmem [shape: f32[4,1], index: 3, kind: input, shape index: {}]
  %s4 = inlined_call_operand.vmem [shape: f32[4,36], index: 4, kind: input, shape index: {}]
  %s5 = inlined_call_operand.vmem [shape: f32[4,1], index: 5, kind: input, shape index: {}]
  %s6 = inlined_call_operand.hbm [shape: f32[2,4,256], index: 6, kind: output, shape index: {}]
  %s7 = sld [smem:[#allocation0]]
  $region65: #{tpu_custom_call.1} parent=0
    _
  %s9 = ssub.s32 1, %s7
  %s10 = scalar_select 0, %s9, %s7
  $region1: #{tpu_custom_call.1} parent=0
    #allocation2 [shape = 'u8[8192]{0}', space=vmem, size = 0x2000, scoped, tag = 'input window, operand 0']
    #allocation3 [shape = 's32[2]{0}', space=sflag, size = 0x8, scoped, tag = 'scoped memory for tpu_custom_call.1']
    #allocation4 [shape = 's32[2]{0}', space=sflag, size = 0x8, scoped, tag = 'scoped memory for tpu_custom_call.1']
    #allocation5 [shape = 'u8[16384]{0}', space=vmem, size = 0x4000, scoped, tag = 'input window, operand 1, single buffered']
    #allocation6 [shape = 's32[1]{0}', space=sflag, size = 0x4, scoped, tag = 'scoped memory for tpu_custom_call.1']
    #allocation7 [shape = 'u8[8192]{0}', space=vmem, size = 0x2000, scoped, tag = 'output window, operand 0']
    %11 = vsyncpa [#allocation3], 0
    %s12 = scalar_lea.sflag [#allocation3], 1
    %13 = vsyncpa %s12, 0
    %14 = vsyncpa [#allocation6], 0
    %15 = vsyncpa [#allocation4], 0
    %s16 = scalar_lea.sflag [#allocation4], 1
    %17 = vsyncpa %s16, 0
    loop: start=0, step=1, limit=4
    $region2: #{tpu_custom_call.1} parent=1 // loop_pre_header
      _
    $region3: #{tpu_custom_call.1} parent=1 // loop_header
      %s19 = sphi 0, %s23
      %p20 = scmp.ge.s32.totalorder %s19, 4
      %s29 = sphi 0, %s31
      %s32 = sphi 0, %s29
      %s33 = sphi 0, %s32
      %s49 = sphi 0, %s33
      %s53 = sphi 0, %s53
      %s55 = sphi 0, %s53
      %s56 = sphi 0, %s55
      %s70 = sphi 0, %s56
      %s74 = sphi 0, %s74
      %s76 = sphi 0, %s74
      %s77 = sphi 0, %s76
      %s91 = sphi 0, %s77
      %s95 = sphi 0, %s95
      %s97 = sphi 0, %s95
      %s98 = sphi 0, %s97
      %s112 = sphi 0, %s98
      %s116 = sphi 0, %s116
      %s118 = sphi 0, %s116
      %s119 = sphi 0, %s118
      %s133 = sphi 0, %s119
      %s137 = sphi 0, %s137
      %s139 = sphi 0, %s137
      %s140 = sphi 0, %s139
      %s154 = sphi 0, %s140
      %s160 = sphi 0, %s162
      %s163 = sphi 0, %s160
      %s164 = sphi 0, %s163
      %s180 = sphi 0, %s164
    $region4: #{tpu_custom_call.1} parent=1 // loop_header_branch
      %22 = sbr.rel (%p20) target = $region8
    $region5: #{tpu_custom_call.1} parent=1 // loop_body
      %s24 = ssub.s32 %s19, 1
      %s25 = ssub.s32 %s19, 2
      %s26 = sadd.s32 %s19, 1
      %s27 = ssub.s32 %s19, %s26
      %p28 = scmp.eq.s32.totalorder %s27, 0
      %s30 = sadd.s32 %s29, 1
      %s31 = scalar_select %p28, %s29, %s30
      %p34 = pneg %p28
      %p35 = scmp.eq.s32.totalorder %s19, 1
      %p36 = por %p34, %p35
      %p37 = scmp.ne.s32.totalorder %s29, %s32
      %p38 = scmp.eq.s32.totalorder %s19, 0
      %p39 = por %p37, %p38
      %p40 = scmp.ne.s32.totalorder %s29, %s32
      %p41 = scmp.eq.s32.totalorder %s24, 1
      %p42 = por %p40, %p41
      %p43 = scmp.ne.s32.totalorder %s32, %s33
      %p44 = scmp.eq.s32.totalorder %s24, 0
      %p45 = por %p43, %p44
      %p46 = scmp.ne.s32.totalorder %s32, %s33
      %p47 = scmp.eq.s32.totalorder %s25, 1
      %p48 = por %p46, %p47
      %p50 = scmp.ne.s32.totalorder %s33, %s49
      %p51 = scmp.eq.s32.totalorder %s25, 0
      %p52 = por %p50, %p51
      %s54 = sadd.s32 %s53, 1
      %p57 = scmp.eq.s32.totalorder %s19, 1
      %p58 = scmp.ne.s32.totalorder %s53, %s55
      %p59 = scmp.eq.s32.totalorder %s19, 0
      %p60 = por %p58, %p59
      %p61 = scmp.ne.s32.totalorder %s53, %s55
      %p62 = scmp.eq.s32.totalorder %s24, 1
      %p63 = por %p61, %p62
      %p64 = scmp.ne.s32.totalorder %s55, %s56
      %p65 = scmp.eq.s32.totalorder %s24, 0
      %p66 = por %p64, %p65
      %p67 = scmp.ne.s32.totalorder %s55, %s56
      %p68 = scmp.eq.s32.totalorder %s25, 1
      %p69 = por %p67, %p68
      %p71 = scmp.ne.s32.totalorder %s56, %s70
      %p72 = scmp.eq.s32.totalorder %s25, 0
      %p73 = por %p71, %p72
      %s75 = sadd.s32 %s74, 1
      %p78 = scmp.eq.s32.totalorder %s19, 1
      %p79 = scmp.ne.s32.totalorder %s74, %s76
      %p80 = scmp.eq.s32.totalorder %s19, 0
      %p81 = por %p79, %p80
      %p82 = scmp.ne.s32.totalorder %s74, %s76
      %p83 = scmp.eq.s32.totalorder %s24, 1
      %p84 = por %p82, %p83
      %p85 = scmp.ne.s32.totalorder %s76, %s77
      %p86 = scmp.eq.s32.totalorder %s24, 0
      %p87 = por %p85, %p86
      %p88 = scmp.ne.s32.totalorder %s76, %s77
      %p89 = scmp.eq.s32.totalorder %s25, 1
      %p90 = por %p88, %p89
      %p92 = scmp.ne.s32.totalorder %s77, %s91
      %p93 = scmp.eq.s32.totalorder %s25, 0
      %p94 = por %p92, %p93
      %s96 = sadd.s32 %s95, 1
      %p99 = scmp.eq.s32.totalorder %s19, 1
      %p100 = scmp.ne.s32.totalorder %s95, %s97
      %p101 = scmp.eq.s32.totalorder %s19, 0
      %p102 = por %p100, %p101
      %p103 = scmp.ne.s32.totalorder %s95, %s97
      %p104 = scmp.eq.s32.totalorder %s24, 1
      %p105 = por %p103, %p104
      %p106 = scmp.ne.s32.totalorder %s97, %s98
      %p107 = scmp.eq.s32.totalorder %s24, 0
      %p108 = por %p106, %p107
      %p109 = scmp.ne.s32.totalorder %s97, %s98
      %p110 = scmp.eq.s32.totalorder %s25, 1
      %p111 = por %p109, %p110
      %p113 = scmp.ne.s32.totalorder %s98, %s112
      %p114 = scmp.eq.s32.totalorder %s25, 0
      %p115 = por %p113, %p114
      %s117 = sadd.s32 %s116, 1
      %p120 = scmp.eq.s32.totalorder %s19, 1
      %p121 = scmp.ne.s32.totalorder %s116, %s118
      %p122 = scmp.eq.s32.totalorder %s19, 0
      %p123 = por %p121, %p122
      %p124 = scmp.ne.s32.totalorder %s116, %s118
      %p125 = scmp.eq.s32.totalorder %s24, 1
      %p126 = por %p124, %p125
      %p127 = scmp.ne.s32.totalorder %s118, %s119
      %p128 = scmp.eq.s32.totalorder %s24, 0
      %p129 = por %p127, %p128
      %p130 = scmp.ne.s32.totalorder %s118, %s119
      %p131 = scmp.eq.s32.totalorder %s25, 1
      %p132 = por %p130, %p131
      %p134 = scmp.ne.s32.totalorder %s119, %s133
      %p135 = scmp.eq.s32.totalorder %s25, 0
      %p136 = por %p134, %p135
      %s138 = sadd.s32 %s137, 1
      %p141 = scmp.eq.s32.totalorder %s19, 1
      %p142 = scmp.ne.s32.totalorder %s137, %s139
      %p143 = scmp.eq.s32.totalorder %s19, 0
      %p144 = por %p142, %p143
      %p145 = scmp.ne.s32.totalorder %s137, %s139
      %p146 = scmp.eq.s32.totalorder %s24, 1
      %p147 = por %p145, %p146
      %p148 = scmp.ne.s32.totalorder %s139, %s140
      %p149 = scmp.eq.s32.totalorder %s24, 0
      %p150 = por %p148, %p149
      %p151 = scmp.ne.s32.totalorder %s139, %s140
      %p152 = scmp.eq.s32.totalorder %s25, 1
      %p153 = por %p151, %p152
      %p155 = scmp.ne.s32.totalorder %s140, %s154
      %p156 = scmp.eq.s32.totalorder %s25, 0
      %p157 = por %p155, %p156
      %s158 = ssub.s32 %s19, %s26
      %p159 = scmp.eq.s32.totalorder %s158, 0
      %s161 = sadd.s32 %s160, 1
      %s162 = scalar_select %p159, %s160, %s161
      %p165 = pneg %p159
      %p166 = scmp.eq.s32.totalorder %s19, 1
      %p167 = por %p165, %p166
      %p168 = scmp.ne.s32.totalorder %s160, %s163
      %p169 = scmp.eq.s32.totalorder %s19, 0
      %p170 = por %p168, %p169
      %p171 = scmp.ne.s32.totalorder %s160, %s163
      %p172 = scmp.eq.s32.totalorder %s24, 1
      %p173 = por %p171, %p172
      %p174 = scmp.ne.s32.totalorder %s163, %s164
      %p175 = scmp.eq.s32.totalorder %s24, 0
      %p176 = por %p174, %p175
      %p177 = scmp.ne.s32.totalorder %s163, %s164
      %p178 = scmp.eq.s32.totalorder %s25, 1
      %p179 = por %p177, %p178
      %p181 = scmp.ne.s32.totalorder %s164, %s180
      %p182 = scmp.eq.s32.totalorder %s25, 0
      %p183 = por %p181, %p182
      %p184 = scmp.le.s32.totalorder 1, %s19
      %p185 = scmp.lt.s32.totalorder %s19, 3
      %p186 = pnand %p184, %p185
      %p187 = pneg %p186
      // Predicated region
      $region9: #{tpu_custom_call.1} parent=5 // pred_check
        _
      $region10: #{tpu_custom_call.1} parent=5 // pred_check_branch
        %189 = sbr.rel (%p186) target = $region12
      $region11: #{tpu_custom_call.1} parent=5 // pred_region
        %s190 = ssub.s32 %s19, 1
        // Predicated region
        $region13: #{tpu_custom_call.1} parent=11 // pred_check
          %p191 = pneg %p66
        $region14: #{tpu_custom_call.1} parent=11 // pred_check_branch
          %193 = sbr.rel (%p191) target = $region16
        $region15: #{tpu_custom_call.1} parent=11 // pred_region
          %s195 = ssub.s32 512, 512
          %196 = vsyncadd [#allocation6], %s195
          %s197 = sshll.u32 [#allocation5], 4
          %s198 = int_to_ptr.vmem [resolvable:$true] %s197
          %203 = dma.hbm_to_vmem [thread:$0]  %s1, 512, %s198, [#allocation6], 256, 256, 16
        $region16: #{tpu_custom_call.1} parent=11 // pred_fallthru
          _
        // Predicated region
        $region17: #{tpu_custom_call.1} parent=11 // pred_check
          %p204 = pneg %p87
        $region18: #{tpu_custom_call.1} parent=11 // pred_check_branch
          %206 = sbr.rel (%p204) target = $region20
        $region19: #{tpu_custom_call.1} parent=11 // pred_region
          _
        $region20: #{tpu_custom_call.1} parent=11 // pred_fallthru
          _
        // Predicated region
        $region21: #{tpu_custom_call.1} parent=11 // pred_check
          %p207 = pneg %p108
        $region22: #{tpu_custom_call.1} parent=11 // pred_check_branch
          %209 = sbr.rel (%p207) target = $region24
        $region23: #{tpu_custom_call.1} parent=11 // pred_region
          _
        $region24: #{tpu_custom_call.1} parent=11 // pred_fallthru
          _
        // Predicated region
        $region25: #{tpu_custom_call.1} parent=11 // pred_check
          %p210 = pneg %p129
        $region26: #{tpu_custom_call.1} parent=11 // pred_check_branch
          %212 = sbr.rel (%p210) target = $region28
        $region27: #{tpu_custom_call.1} parent=11 // pred_region
          _
        $region28: #{tpu_custom_call.1} parent=11 // pred_fallthru
          _
        // Predicated region
        $region29: #{tpu_custom_call.1} parent=11 // pred_check
          %p213 = pneg %p150
        $region30: #{tpu_custom_call.1} parent=11 // pred_check_branch
          %215 = sbr.rel (%p213) target = $region32
        $region31: #{tpu_custom_call.1} parent=11 // pred_region
          _
        $region32: #{tpu_custom_call.1} parent=11 // pred_fallthru
          _
      $region12: #{tpu_custom_call.1} parent=5 // pred_fallthru
        _
      %p216 = scmp.lt.s32.totalorder %s19, 2
      // Predicated region
      $region33: #{tpu_custom_call.1} parent=5 // pred_check
        %p217 = pneg %p216
      $region34: #{tpu_custom_call.1} parent=5 // pred_check_branch
        %219 = sbr.rel (%p217) target = $region36
      $region35: #{tpu_custom_call.1} parent=5 // pred_region
        // Predicated region
        $region37: #{tpu_custom_call.1} parent=35 // pred_check
          %p220 = pneg %p39
        $region38: #{tpu_custom_call.1} parent=35 // pred_check_branch
          %222 = sbr.rel (%p220) target = $region40
        $region39: #{tpu_custom_call.1} parent=35 // pred_region
          %s223 = sand.u32 %s29, 1
          %s224 = scalar_lea.sflag [#allocation3], %s223
          %s225 = sand.u32 %s29, 1
          %s226 = smul.addr %s225, 8
          %s227 = scalar_lea.vmem [#allocation2], %s226
          %s229 = ssub.s32 128, 128
          %230 = vsyncadd %s224, %s229
          %s231 = smul.addr %s19, 2
          %s232 = smul.addr %s231, 64
          %s233 = scalar_lea.hbm %s0, %s232
          %s235 = sshll.u32 %s227, 4
          %s236 = int_to_ptr.vmem [resolvable:$true] %s235
          %238 = dma.hbm_to_vmem [thread:$0]  %s233, 128, %s236, %s224
        $region40: #{tpu_custom_call.1} parent=35 // pred_fallthru
          _
      $region36: #{tpu_custom_call.1} parent=5 // pred_fallthru
        _
      %p239 = scmp.le.s32.totalorder 1, %s19
      %p240 = scmp.lt.s32.totalorder %s19, 3
      %p241 = pnand %p239, %p240
      %p242 = pneg %p241
      // Predicated region
      $region41: #{tpu_custom_call.1} parent=5 // pred_check
        _
      $region42: #{tpu_custom_call.1} parent=5 // pred_check_branch
        %244 = sbr.rel (%p241) target = $region44
      $region43: #{tpu_custom_call.1} parent=5 // pred_region
        %s245 = ssub.s32 %s19, 1
        %s246 = sand.u32 %s32, 1
        %s247 = scalar_lea.sflag [#allocation3], %s246
        %s248 = sand.u32 %s32, 1
        %s249 = smul.addr %s248, 8
        %s250 = scalar_lea.vmem [#allocation2], %s249
        // Predicated region
        $region45: #{tpu_custom_call.1} parent=43 // pred_check
          %p251 = pneg %p45
        $region46: #{tpu_custom_call.1} parent=43 // pred_check_branch
          %253 = sbr.rel (%p251) target = $region48
        $region47: #{tpu_custom_call.1} parent=43 // pred_region
          %254 = dma.done %s247, 128
        $region48: #{tpu_custom_call.1} parent=43 // pred_fallthru
          _
        // Predicated region
        $region49: #{tpu_custom_call.1} parent=43 // pred_check
          %p255 = pneg %p66
        $region50: #{tpu_custom_call.1} parent=43 // pred_check_branch
          %257 = sbr.rel (%p255) target = $region52
        $region51: #{tpu_custom_call.1} parent=43 // pred_region
          %258 = dma.done [#allocation6], 512
        $region52: #{tpu_custom_call.1} parent=43 // pred_fallthru
          _
        %s259 = sand.u32 %s32, 1
        %s260 = scalar_lea.sflag [#allocation3], %s259
        %s261 = sand.u32 %s32, 1
        %s262 = smul.addr %s261, 8
        %s263 = scalar_lea.vmem [#allocation2], %s262
        %p264 = pneg %p45
        %p265 = pneg %p42
        %p266 = pneg %p66
        %p267 = pneg %p63
        %p268 = pneg %p87
        %p269 = pneg %p84
        %p270 = pneg %p108
        %p271 = pneg %p105
        %p272 = pneg %p129
        %p273 = pneg %p126
        %p274 = pneg %p150
        %p275 = pneg %p147
        %p276 = pneg %p176
        %p277 = pneg %p173
        %s278 = sand.u32 %s163, 1
        %s279 = scalar_lea.sflag [#allocation4], %s278
        %s280 = sand.u32 %s163, 1
        %s281 = smul.addr %s280, 8
        %s282 = scalar_lea.vmem [#allocation7], %s281
        %v283 = vld [vmem:[%s250] sm:$0xff]
        %v284 = vld [vmem:[#allocation5] sm:$0xff]
        %v285 = vld [vmem:[#allocation5 + $0x8] sm:$0xff]
        %v286 = vld [vmem:[#allocation5 + $0x10] sm:$0x1]
        %v287 = vld [vmem:[#allocation5 + $0x18] sm:$0x1]
        %v288 = vld [vmem:[%s2] sm:$0xf]
        %v290 = vcombine.high %v283, %v283
        %292 = vrot.lane.b32.xlu0 %v283, 17
        %v293 = vpop.permute.xlu0 %292
        %294 = vrot.lane.b32.xlu0 %v290, 17
        %v295 = vpop.permute.xlu0 %294
        %v296 = vlaneseq
        %v297 = vand.u32 %v296, 127
        %vm298 = vcmp.lt.s32.totalorder %v297, 17
        %v299 = vsel %vm298, %v293, %v295
        %v300 = vsel %vm298, %v295, %v293
        %v301 = vlaneseq
        %v302 = vshrl.u32 %v301, 7
        %v303 = vsub.s32 0, %v302
        %v304 = vrot.slane %v284, %v303
        %v305 = vlaneseq
        %v306 = vshrl.u32 %v305, 7
        %v307 = vsub.s32 0, %v306
        %v308 = vrot.slane %v285, %v307
        %v309 = vmul.f32 %v300, %v304
        %v310 = vmul.f32 %v299, %v308
        %311 = vrot.lane.b32.xlu0 %v283, 16
        %v312 = vpop.permute.xlu0 %311
        %313 = vrot.lane.b32.xlu0 %v290, 16
        %v314 = vpop.permute.xlu0 %313
        %vm315 = vcmp.lt.s32.totalorder %v297, 16
        %v316 = vsel %vm315, %v312, %v314
        %v317 = vsel %vm315, %v314, %v312
        %v318 = vlaneseq
        %v319 = vshrl.u32 %v318, 7
        %v320 = vsub.s32 1, %v319
        %v321 = vrot.slane %v284, %v320
        %v322 = vlaneseq
        %v323 = vshrl.u32 %v322, 7
        %v324 = vsub.s32 1, %v323
        %v325 = vrot.slane %v285, %v324
        %v326 = vmul.f32 %v317, %v321
        %v327 = vmul.f32 %v316, %v325
        %328 = vrot.lane.b32.xlu0 %v283, 15
        %v329 = vpop.permute.xlu0 %328
        %330 = vrot.lane.b32.xlu0 %v290, 15
        %v331 = vpop.permute.xlu0 %330
        %vm332 = vcmp.lt.s32.totalorder %v297, 15
        %v333 = vsel %vm332, %v329, %v331
        %v334 = vsel %vm332, %v331, %v329
        %v335 = vlaneseq
        %v336 = vshrl.u32 %v335, 7
        %v337 = vsub.s32 2, %v336
        %v338 = vrot.slane %v284, %v337
        %v339 = vlaneseq
        %v340 = vshrl.u32 %v339, 7
        %v341 = vsub.s32 2, %v340
        %v342 = vrot.slane %v285, %v341
        %v343 = vmul.f32 %v334, %v338
        %v344 = vmul.f32 %v333, %v342
        %345 = vrot.lane.b32.xlu0 %v283, 1
        %v346 = vpop.permute.xlu0 %345
        %347 = vrot.lane.b32.xlu0 %v290, 1
        %v348 = vpop.permute.xlu0 %347
        %vm349 = vcmp.lt.s32.totalorder %v297, 1
        %v350 = vsel %vm349, %v346, %v348
        %v351 = vsel %vm349, %v348, %v346
        %v352 = vlaneseq
        %v353 = vshrl.u32 %v352, 7
        %v354 = vsub.s32 3, %v353
        %v355 = vrot.slane %v284, %v354
        %v356 = vlaneseq
        %v357 = vshrl.u32 %v356, 7
        %v358 = vsub.s32 3, %v357
        %v359 = vrot.slane %v285, %v358
        %v360 = vmul.f32 %v351, %v355
        %v361 = vmul.f32 %v350, %v359
        %v362 = vlaneseq
        %v363 = vshrl.u32 %v362, 7
        %v364 = vsub.s32 4, %v363
        %v365 = vrot.slane %v284, %v364
        %v366 = vlaneseq
        %v367 = vshrl.u32 %v366, 7
        %v368 = vsub.s32 4, %v367
        %v369 = vrot.slane %v285, %v368
        %v372 = vcombine.low %v365, %v369
        %v374 = vmul.f32 %v283, %v372
        %375 = vrot.lane.b32.xlu0 %v283, 127
        %v376 = vpop.permute.xlu0 %375
        %377 = vrot.lane.b32.xlu0 %v290, 127
        %v378 = vpop.permute.xlu0 %377
        %vm379 = vcmp.lt.s32.totalorder %v297, 127
        %v380 = vsel %vm379, %v376, %v378
        %v381 = vsel %vm379, %v378, %v376
        %v382 = vlaneseq
        %v383 = vshrl.u32 %v382, 7
        %v384 = vsub.s32 5, %v383
        %v385 = vrot.slane %v284, %v384
        %v386 = vlaneseq
        %v387 = vshrl.u32 %v386, 7
        %v388 = vsub.s32 5, %v387
        %v389 = vrot.slane %v285, %v388
        %v390 = vmul.f32 %v380, %v385
        %v391 = vmul.f32 %v381, %v389
        %392 = vrot.lane.b32.xlu0 %v283, 113
        %v393 = vpop.permute.xlu0 %392
        %394 = vrot.lane.b32.xlu0 %v290, 113
        %v395 = vpop.permute.xlu0 %394
        %vm396 = vcmp.lt.s32.totalorder %v297, 113
        %v397 = vsel %vm396, %v393, %v395
        %v398 = vsel %vm396, %v395, %v393
        %v399 = vlaneseq
        %v400 = vshrl.u32 %v399, 7
        %v401 = vsub.s32 6, %v400
        %v402 = vrot.slane %v284, %v401
        %v403 = vlaneseq
        %v404 = vshrl.u32 %v403, 7
        %v405 = vsub.s32 6, %v404
        %v406 = vrot.slane %v285, %v405
        %v407 = vmul.f32 %v397, %v402
        %v408 = vmul.f32 %v398, %v406
        %409 = vrot.lane.b32.xlu0 %v283, 112
        %v410 = vpop.permute.xlu0 %409
        %411 = vrot.lane.b32.xlu0 %v290, 112
        %v412 = vpop.permute.xlu0 %411
        %vm413 = vcmp.lt.s32.totalorder %v297, 112
        %v414 = vsel %vm413, %v410, %v412
        %v415 = vsel %vm413, %v412, %v410
        %v416 = vlaneseq
        %v417 = vshrl.u32 %v416, 7
        %v418 = vsub.s32 7, %v417
        %v419 = vrot.slane %v284, %v418
        %v420 = vlaneseq
        %v421 = vshrl.u32 %v420, 7
        %v422 = vsub.s32 7, %v421
        %v423 = vrot.slane %v285, %v422
        %v424 = vmul.f32 %v414, %v419
        %v425 = vmul.f32 %v415, %v423
        %426 = vrot.lane.b32.xlu0 %v283, 111
        %v427 = vpop.permute.xlu0 %426
        %428 = vrot.lane.b32.xlu0 %v290, 111
        %v429 = vpop.permute.xlu0 %428
        %vm430 = vcmp.lt.s32.totalorder %v297, 111
        %v431 = vsel %vm430, %v427, %v429
        %v432 = vsel %vm430, %v429, %v427
        %v433 = vlaneseq
        %v434 = vshrl.u32 %v433, 7
        %v435 = vsub.s32 0, %v434
        %v436 = vrot.slane %v286, %v435
        %v437 = vlaneseq
        %v438 = vshrl.u32 %v437, 7
        %v439 = vsub.s32 0, %v438
        %v440 = vrot.slane %v287, %v439
        %v441 = vmul.f32 %v431, %v436
        %v442 = vmul.f32 %v432, %v440
        %v445 = vrot.slane %v326, 4
        %v446 = vrot.slane %v327, 4
        %v451 = vrot.slane %v360, 4
        %v452 = vrot.slane %v361, 4
        %v456 = vcombine.high %v374, %v374
        %v460 = vrot.slane %v390, 4
        %v461 = vrot.slane %v391, 4
        %v466 = vrot.slane %v424, 4
        %v467 = vrot.slane %v425, 4
        %vm470 = vcmask 1043456
        %v471 = vsel %vm470, %v309, %v445
        %v472 = vsel %vm470, %v310, %v446
        %v473 = vsel %vm470, %v343, %v451
        %v474 = vsel %vm470, %v344, %v452
        %v475 = vsel %vm470, %v374, %v460
        %v476 = vsel %vm470, %v456, %v461
        %v477 = vsel %vm470, %v407, %v466
        %v478 = vsel %vm470, %v408, %v467
        %v479 = vld [vmem:[%s3] sm:$0xf]
        %481 = vset.pattern.permute.xlu0 0
        %482 = vperm.xlu0 %481, %v479
        %v483 = vpop.permute.xlu0 %482
        %vm485 = vcmask 293888
        %v487 = vsel %vm485, %v288, 0
        %v490 = vsel %vm470, %v441, 0
        %v493 = vsel %vm470, %v442, 0
        %495 = vmatprep.subr.mxu0 %v472
        %496 = vmatpush1.msra.mxu0 %v471
        %497 = vmatprep.subr.mxu0 %v474
        %498 = vmatpush1.msra.mxu0 %v473
        %499 = vmatprep.subr.mxu0 %v476
        %500 = vmatpush1.msra.mxu0 %v475
        %501 = vmatprep.subr.mxu0 %v478
        %502 = vmatpush1.msra.mxu0 %v477
        %503 = vmatprep.subr.mxu0 %v493
        %504 = vmatpush1.msra.mxu0 %v490
        %505 = vmatprep.subr.mxu0 0.0
        %506 = vmatpush1.msra.mxu0 0.0
        %507 = vmatprep.subr.mxu0 0.0
        %508 = vmatpush1.msra.mxu0 0.0
        %509 = vmatprep.subr.mxu0 0.0
        %510 = vmatpush1.msra.mxu0 0.0
        %511 = vmatprep.subr.mxu0 0.0
        %512 = vmatpush1.msra.mxu0 0.0
        %513 = vmatprep.subr.mxu0 0.0
        %514 = vmatpush1.msra.mxu0 0.0
        %515 = vmatprep.subr.mxu0 0.0
        %516 = vmatpush1.msra.mxu0 0.0
        %517 = vmatprep.subr.mxu0 0.0
        %518 = vmatpush1.msra.mxu0 0.0
        %519 = vmatprep.subr.mxu0 0.0
        %520 = vmatpush1.msra.mxu0 0.0
        %521 = vmatprep.subr.mxu0 0.0
        %522 = vmatpush1.msra.mxu0 0.0
        %523 = vmatprep.subr.mxu0 0.0
        %524 = vmatpush1.msra.mxu0 0.0
        %525 = vmatprep.subr.mxu0 0.0
        %526 = vmatpush1.msra.mxu0 0.0
        %527 = vmatprep.subr.mxu0 0.0
        %528 = vmatpush1.msra.mxu0 0.0
        %529 = vmatprep.subr.mxu0 0.0
        %530 = vmatpush1.msra.mxu0 0.0
        %531 = vmatprep.subr.mxu0 0.0
        %532 = vmatpush1.msra.mxu0 0.0
        %533 = vmatprep.subr.mxu0 0.0
        %534 = vmatpush1.msra.mxu0 0.0
        %535 = vmatprep.subr.mxu0 0.0
        %536 = vmatpush1.msra.mxu0 0.0
        %537 = vmatprep.subr.mxu0 0.0
        %538 = vmatpush1.msra.mxu0 0.0
        %539 = vmatprep.subr.mxu0 0.0
        %540 = vmatpush1.msra.mxu0 0.0
        %541 = vmatprep.subr.mxu0 0.0
        %542 = vmatpush1.msra.mxu0 0.0
        %543 = vmatprep.subr.mxu0 0.0
        %544 = vmatpush1.msra.mxu0 0.0
        %545 = vmatprep.subr.mxu0 0.0
        %546 = vmatpush1.msra.mxu0 0.0
        %547 = vmatprep.subr.mxu0 0.0
        %548 = vmatpush1.msra.mxu0 0.0
        %549 = vmatprep.subr.mxu0 0.0
        %550 = vmatpush1.msra.mxu0 0.0
        %551 = vmatprep.subr.mxu0 0.0
        %552 = vmatpush1.msra.mxu0 0.0
        %553 = vmatprep.subr.mxu0 0.0
        %554 = vmatpush1.msra.mxu0 0.0
        %555 = vmatprep.subr.mxu0 0.0
        %556 = vmatpush1.msra.mxu0 0.0
        %557 = vmatprep.subr.mxu0 0.0
        %558 = vmatpush1.msra.mxu0 0.0
        %559 = vmatprep.mubr.f32.mxu0 0.0
        %560 = vmatmul.mubr.f32.gmra.mrb[0].mxu0 %v487
        %v561 = vpop.f32.mrb[0].mxu0
        %v562 = vadd.f32 %v483, %v561
        %v563 = vpop.f32.mrb[0].mxu0
        %v564 = vadd.f32 %v483, %v563
        %565 = vdwg.mxu0
        %v566 = vmax.f32 %v562, 0.0
        %v567 = vmax.f32 %v564, 0.0
        %v568 = vld [vmem:[%s4] sm:$0xf]
        %569 = vrot.lane.b32.xlu0 %v566, 17
        %v570 = vpop.permute.xlu0 %569
        %571 = vrot.lane.b32.xlu0 %v567, 17
        %v572 = vpop.permute.xlu0 %571
        %v573 = vsel %vm298, %v570, %v572
        %v574 = vsel %vm298, %v572, %v570
        %v575 = vmul.f32 %v574, %v304
        %v576 = vmul.f32 %v573, %v308
        %577 = vrot.lane.b32.xlu0 %v566, 16
        %v578 = vpop.permute.xlu0 %577
        %579 = vrot.lane.b32.xlu0 %v567, 16
        %v580 = vpop.permute.xlu0 %579
        %v581 = vsel %vm315, %v578, %v580
        %v582 = vsel %vm315, %v580, %v578
        %v583 = vmul.f32 %v582, %v321
        %v584 = vmul.f32 %v581, %v325
        %585 = vrot.lane.b32.xlu0 %v566, 15
        %v586 = vpop.permute.xlu0 %585
        %587 = vrot.lane.b32.xlu0 %v567, 15
        %v588 = vpop.permute.xlu0 %587
        %v589 = vsel %vm332, %v586, %v588
        %v590 = vsel %vm332, %v588, %v586
        %v591 = vmul.f32 %v590, %v338
        %v592 = vmul.f32 %v589, %v342
        %593 = vrot.lane.b32.xlu0 %v566, 1
        %v594 = vpop.permute.xlu0 %593
        %595 = vrot.lane.b32.xlu0 %v567, 1
        %v596 = vpop.permute.xlu0 %595
        %v597 = vsel %vm349, %v594, %v596
        %v598 = vsel %vm349, %v596, %v594
        %v599 = vmul.f32 %v598, %v355
        %v600 = vmul.f32 %v597, %v359
        %v601 = vmul.f32 %v566, %v365
        %v602 = vmul.f32 %v567, %v369
        %603 = vrot.lane.b32.xlu0 %v566, 127
        %v604 = vpop.permute.xlu0 %603
        %605 = vrot.lane.b32.xlu0 %v567, 127
        %v606 = vpop.permute.xlu0 %605
        %v607 = vsel %vm379, %v604, %v606
        %v608 = vsel %vm379, %v606, %v604
        %v609 = vmul.f32 %v607, %v385
        %v610 = vmul.f32 %v608, %v389
        %611 = vrot.lane.b32.xlu0 %v566, 113
        %v612 = vpop.permute.xlu0 %611
        %613 = vrot.lane.b32.xlu0 %v567, 113
        %v614 = vpop.permute.xlu0 %613
        %v615 = vsel %vm396, %v612, %v614
        %v616 = vsel %vm396, %v614, %v612
        %v617 = vmul.f32 %v615, %v402
        %v618 = vmul.f32 %v616, %v406
        %619 = vrot.lane.b32.xlu0 %v566, 112
        %v620 = vpop.permute.xlu0 %619
        %621 = vrot.lane.b32.xlu0 %v567, 112
        %v622 = vpop.permute.xlu0 %621
        %v623 = vsel %vm413, %v620, %v622
        %v624 = vsel %vm413, %v622, %v620
        %v625 = vmul.f32 %v623, %v419
        %v626 = vmul.f32 %v624, %v423
        %627 = vrot.lane.b32.xlu0 %v566, 111
        %v628 = vpop.permute.xlu0 %627
        %629 = vrot.lane.b32.xlu0 %v567, 111
        %v630 = vpop.permute.xlu0 %629
        %v631 = vsel %vm430, %v628, %v630
        %v632 = vsel %vm430, %v630, %v628
        %v633 = vmul.f32 %v631, %v436
        %v634 = vmul.f32 %v632, %v440
        %v637 = vrot.slane %v583, 4
        %v638 = vrot.slane %v584, 4
        %v643 = vrot.slane %v599, 4
        %v644 = vrot.slane %v600, 4
        %v649 = vrot.slane %v609, 4
        %v650 = vrot.slane %v610, 4
        %v655 = vrot.slane %v625, 4
        %v656 = vrot.slane %v626, 4
        %v659 = vsel %vm470, %v575, %v637
        %v660 = vsel %vm470, %v576, %v638
        %v661 = vsel %vm470, %v591, %v643
        %v662 = vsel %vm470, %v592, %v644
        %v663 = vsel %vm470, %v601, %v649
        %v664 = vsel %vm470, %v602, %v650
        %v665 = vsel %vm470, %v617, %v655
        %v666 = vsel %vm470, %v618, %v656
        %v667 = vld [vmem:[%s5] sm:$0xf]
        %669 = vset.pattern.permute.xlu0 0
        %670 = vperm.xlu0 %669, %v667
        %v671 = vpop.permute.xlu0 %670
        %v674 = vsel %vm485, %v568, 0
        %v677 = vsel %vm470, %v633, 0
        %v680 = vsel %vm470, %v634, 0
        %682 = vmatprep.subr.mxu0 %v660
        %683 = vmatpush1.msra.mxu0 %v659
        %684 = vmatprep.subr.mxu0 %v662
        %685 = vmatpush1.msra.mxu0 %v661
        %686 = vmatprep.subr.mxu0 %v664
        %687 = vmatpush1.msra.mxu0 %v663
        %688 = vmatprep.subr.mxu0 %v666
        %689 = vmatpush1.msra.mxu0 %v665
        %690 = vmatprep.subr.mxu0 %v680
        %691 = vmatpush1.msra.mxu0 %v677
        %692 = vmatprep.subr.mxu0 0.0
        %693 = vmatpush1.msra.mxu0 0.0
        %694 = vmatprep.subr.mxu0 0.0
        %695 = vmatpush1.msra.mxu0 0.0
        %696 = vmatprep.subr.mxu0 0.0
        %697 = vmatpush1.msra.mxu0 0.0
        %698 = vmatprep.subr.mxu0 0.0
        %699 = vmatpush1.msra.mxu0 0.0
        %700 = vmatprep.subr.mxu0 0.0
        %701 = vmatpush1.msra.mxu0 0.0
        %702 = vmatprep.subr.mxu0 0.0
        %703 = vmatpush1.msra.mxu0 0.0
        %704 = vmatprep.subr.mxu0 0.0
        %705 = vmatpush1.msra.mxu0 0.0
        %706 = vmatprep.subr.mxu0 0.0
        %707 = vmatpush1.msra.mxu0 0.0
        %708 = vmatprep.subr.mxu0 0.0
        %709 = vmatpush1.msra.mxu0 0.0
        %710 = vmatprep.subr.mxu0 0.0
        %711 = vmatpush1.msra.mxu0 0.0
        %712 = vmatprep.subr.mxu0 0.0
        %713 = vmatpush1.msra.mxu0 0.0
        %714 = vmatprep.subr.mxu0 0.0
        %715 = vmatpush1.msra.mxu0 0.0
        %716 = vmatprep.subr.mxu0 0.0
        %717 = vmatpush1.msra.mxu0 0.0
        %718 = vmatprep.subr.mxu0 0.0
        %719 = vmatpush1.msra.mxu0 0.0
        %720 = vmatprep.subr.mxu0 0.0
        %721 = vmatpush1.msra.mxu0 0.0
        %722 = vmatprep.subr.mxu0 0.0
        %723 = vmatpush1.msra.mxu0 0.0
        %724 = vmatprep.subr.mxu0 0.0
        %725 = vmatpush1.msra.mxu0 0.0
        %726 = vmatprep.subr.mxu0 0.0
        %727 = vmatpush1.msra.mxu0 0.0
        %728 = vmatprep.subr.mxu0 0.0
        %729 = vmatpush1.msra.mxu0 0.0
        %730 = vmatprep.subr.mxu0 0.0
        %731 = vmatpush1.msra.mxu0 0.0
        %732 = vmatprep.subr.mxu0 0.0
        %733 = vmatpush1.msra.mxu0 0.0
        %734 = vmatprep.subr.mxu0 0.0
        %735 = vmatpush1.msra.mxu0 0.0
        %736 = vmatprep.subr.mxu0 0.0
        %737 = vmatpush1.msra.mxu0 0.0
        %738 = vmatprep.subr.mxu0 0.0
        %739 = vmatpush1.msra.mxu0 0.0
        %740 = vmatprep.subr.mxu0 0.0
        %741 = vmatpush1.msra.mxu0 0.0
        %742 = vmatprep.subr.mxu0 0.0
        %743 = vmatpush1.msra.mxu0 0.0
        %744 = vmatprep.subr.mxu0 0.0
        %745 = vmatpush1.msra.mxu0 0.0
        %746 = vmatprep.mubr.f32.mxu0 0.0
        %747 = vmatmul.mubr.f32.gmra.mrb[0].mxu0 %v674
        %v748 = vpop.f32.mrb[0].mxu0
        %v749 = vadd.f32 %v671, %v748
        %v750 = vpop.f32.mrb[0].mxu0
        %v751 = vadd.f32 %v671, %v750
        %752 = vdwg.mxu0
        %v753 = vadd.f32 %v749, %v283
        %v754 = vadd.f32 %v751, %v290
        %v755 = vmax.f32 %v753, 0.0
        %v756 = vmax.f32 %v754, 0.0
        %v759 = vcombine.low %v755, %v756
        %761 = vst [vmem:[%s282] sm:$0xff] %v759
        %s762 = sand.u32 %s163, 1
        %s763 = scalar_lea.sflag [#allocation4], %s762
        %s764 = sand.u32 %s163, 1
        %s765 = smul.addr %s764, 8
        %s766 = scalar_lea.vmem [#allocation7], %s765
        // Predicated region
        $region53: #{tpu_custom_call.1} parent=43 // pred_check
          %p767 = pneg %p173
        $region54: #{tpu_custom_call.1} parent=43 // pred_check_branch
          %769 = sbr.rel (%p767) target = $region56
        $region55: #{tpu_custom_call.1} parent=43 // pred_region
          %s771 = ssub.s32 128, 128
          %772 = vsyncadd %s763, %s771
          %s773 = smul.addr %s24, 2
          %s774 = smul.addr %s773, 64
          %s775 = scalar_lea.hbm %s6, %s774
          %s777 = sshll.u32 %s766, 4
          %s778 = int_to_ptr.vmem [resolvable:$true] %s777
          %780 = dma.vmem_to_hbm [thread:$0]  %s778, 128, %s775, %s763
        $region56: #{tpu_custom_call.1} parent=43 // pred_fallthru
          _
      $region44: #{tpu_custom_call.1} parent=5 // pred_fallthru
        _
      %p781 = scmp.le.s32.totalorder 2, %s19
      // Predicated region
      $region57: #{tpu_custom_call.1} parent=5 // pred_check
        %p782 = pneg %p781
      $region58: #{tpu_custom_call.1} parent=5 // pred_check_branch
        %784 = sbr.rel (%p782) target = $region60
      $region59: #{tpu_custom_call.1} parent=5 // pred_region
        %s785 = ssub.s32 %s19, 2
        // Predicated region
        $region61: #{tpu_custom_call.1} parent=59 // pred_check
          %p786 = pneg %p179
        $region62: #{tpu_custom_call.1} parent=59 // pred_check_branch
          %788 = sbr.rel (%p786) target = $region64
        $region63: #{tpu_custom_call.1} parent=59 // pred_region
          %s789 = sand.u32 %s164, 1
          %s790 = scalar_lea.sflag [#allocation4], %s789
          %s791 = sand.u32 %s164, 1
          %s792 = smul.addr %s791, 8
          %s793 = scalar_lea.vmem [#allocation7], %s792
          %794 = dma.done %s790, 128
        $region64: #{tpu_custom_call.1} parent=59 // pred_fallthru
          _
      $region60: #{tpu_custom_call.1} parent=5 // pred_fallthru
        _
    $region6: #{tpu_custom_call.1} parent=1 // loop_footer
      %s23 = sadd.s32 1, %s19
    $region7: #{tpu_custom_call.1} parent=1 // loop_footer_branch
      %18 = sbr.rel target = $region3
    $region8: #{tpu_custom_call.1} parent=1 // loop_exit
      _
    %795 = vsyncpa [#allocation3], 1
    %s796 = scalar_lea.sflag [#allocation3], 1
    %797 = vsyncpa %s796, 1
    %798 = vsyncpa [#allocation6], 1
    %799 = vsyncpa [#allocation4], 1
    %s800 = scalar_lea.sflag [#allocation4], 1
    %801 = vsyncpa %s800, 1

</llo_original>
